<compile_context>
chip_gen: v6e
topology: v6e:2x2x1
jax: 0.10.0
libtpu: 0.0.40
codegen_flags: <defaults>
</compile_context>

<pallas_src>
import functools

import jax
import jax.numpy as jnp
from jax.experimental import pallas as pl
from jax.experimental.pallas import tpu as pltpu


def _round_up(x, m):
    return ((x + m - 1) // m) * m


def actor_kernel(x_ref, w1_ref, b1_ref, w2_ref, b2_ref, w3_ref, b3_ref, o_ref):
    # Matmul inputs in bf16 (MXU-native on all generations), accumulate in f32.
    x = x_ref[...].astype(w1_ref.dtype)

    # fc1 + relu (bias add / relu stay f32 on the VPU)
    h1 = jnp.dot(x, w1_ref[...], preferred_element_type=jnp.float32) + b1_ref[...]
    h1 = jnp.maximum(h1, 0.0)

    # fc2 + relu
    h2 = jnp.dot(h1.astype(w2_ref.dtype), w2_ref[...],
                 preferred_element_type=jnp.float32) + b2_ref[...]
    h2 = jnp.maximum(h2, 0.0)

    # action_out + softmax(dim=-1); padded action lanes carry a huge negative
    # bias so exp() -> 0 and they contribute nothing to the denominator.
    logits = jnp.dot(h2.astype(w3_ref.dtype), w3_ref[...],
                     preferred_element_type=jnp.float32) + b3_ref[...]
    m = jnp.max(logits, axis=-1, keepdims=True)
    e = jnp.exp(logits - m)
    denom = jnp.sum(e, axis=-1, keepdims=True)
    r = pl.reciprocal(denom, approx=True)   # EUP vrcp (free slot)
    r = r * (2.0 - denom * r)               # one Newton step -> ~1e-6 rel err
    o_ref[...] = (e * r).astype(o_ref.dtype)


@functools.partial(jax.jit, static_argnames=("block_rows",))
def actor_forward(state, params, *, block_rows=256):
    """state: [B, state_size] f32. Returns action_probs: [B, action_size] f32."""
    w1, b1, w2, b2, w3, b3 = params
    B, S = state.shape
    H = w1.shape[1]
    A = w3.shape[1]

    # Lane-dense output: pad action dim up to a multiple of 128.
    A_pad = _round_up(A, 128)
    if A_pad != A:
        w3p = jnp.pad(w3, ((0, 0), (0, A_pad - A)))
        b3p = jnp.pad(b3, ((0, 0), (0, A_pad - A)), constant_values=-1e30)
    else:
        w3p, b3p = w3, b3

    # Batch tiling: TB rows per grid step (>=8-row aligned, capped by B).
    tb = min(block_rows, _round_up(B, 8))
    B_pad = _round_up(B, tb)
    x = state if B_pad == B else jnp.pad(state, ((0, B_pad - B), (0, 0)))
    grid = (B_pad // tb,)

    flops = 2 * B_pad * (S * H + H * H + H * A_pad)
    bytes_accessed = (
        x.size * x.dtype.itemsize
        + sum(int(p.size) * p.dtype.itemsize for p in (w1, b1, w2, b2, w3p, b3p))
        + B_pad * A_pad * 4
    )

    out = pl.pallas_call(
        actor_kernel,
        out_shape=jax.ShapeDtypeStruct((B_pad, A_pad), jnp.float32),
        grid=grid,
        in_specs=[
            pl.BlockSpec((tb, S), lambda i: (i, 0)),        # x: tiled over batch
            pl.BlockSpec((S, H), lambda i: (0, 0)),         # w1: VMEM-resident
            pl.BlockSpec((1, H), lambda i: (0, 0)),         # b1
            pl.BlockSpec((H, H), lambda i: (0, 0)),         # w2
            pl.BlockSpec((1, H), lambda i: (0, 0)),         # b2
            pl.BlockSpec((H, A_pad), lambda i: (0, 0)),     # w3 (padded)
            pl.BlockSpec((1, A_pad), lambda i: (0, 0)),     # b3 (padded)
        ],
        out_specs=pl.BlockSpec((tb, A_pad), lambda i: (i, 0)),
        compiler_params=pltpu.CompilerParams(
            dimension_semantics=("parallel",),
        ),
        cost_estimate=pl.CostEstimate(
            flops=flops,
            transcendentals=B_pad * A_pad,
            bytes_accessed=bytes_accessed,
        ),
    )(x, w1, b1, w2, b2, w3p, b3p)

    return out[:B, :A]


def init_params(key, state_size, action_size, hidden=128):
    """PyTorch-style (Kaiming-uniform bound = 1/sqrt(fan_in)) init.

    Weights stored [in, out] in bf16 (MXU-native); biases [1, out] in f32.
    """
    def linear(key, fan_in, fan_out):
        kw, kb = jax.random.split(key)
        bound = 1.0 / jnp.sqrt(jnp.float32(fan_in))
        w = jax.random.uniform(kw, (fan_in, fan_out), jnp.float32, -bound, bound)
        b = jax.random.uniform(kb, (1, fan_out), jnp.float32, -bound, bound)
        return w.astype(jnp.bfloat16), b

    k1, k2, k3 = jax.random.split(key, 3)
    w1, b1 = linear(k1, state_size, hidden)
    w2, b2 = linear(k2, hidden, hidden)
    w3, b3 = linear(k3, hidden, action_size)
    return (w1, b1, w2, b2, w3, b3)


def ref_forward(state, params):
    """Plain-JAX reference with the same bf16-matmul / f32-accumulate recipe."""
    w1, b1, w2, b2, w3, b3 = params
    f32 = jnp.float32
    h1 = jnp.maximum(
        jnp.dot(state.astype(w1.dtype), w1, preferred_element_type=f32) + b1, 0.0)
    h2 = jnp.maximum(
        jnp.dot(h1.astype(w2.dtype), w2, preferred_element_type=f32) + b2, 0.0)
    logits = jnp.dot(h2.astype(w3.dtype), w3, preferred_element_type=f32) + b3
    return jax.nn.softmax(logits, axis=-1)


if __name__ == "__main__":
    key = jax.random.PRNGKey(0)
    k_params, k_state = jax.random.split(key)

    batch = 8
    state_size = 32
    action_size = 16

    params = init_params(k_params, state_size, action_size)
    state = jax.random.normal(k_state, (batch, state_size), jnp.float32)

    probs = actor_forward(state, params)
    probs = jax.block_until_ready(probs)

    # sanity: shape + softmax rows sum to 1 (approx reciprocal + Newton step)
    assert probs.shape == (batch, action_size)
    assert jnp.allclose(jnp.sum(probs, axis=-1), 1.0, atol=1e-3)

    # reference check in plain JAX (same bf16 matmul inputs, f32 accumulation)
    ref = ref_forward(state, params)
    assert jnp.allclose(probs, ref, atol=2e-3)

    print("KERNEL_OK")
</pallas_src>

<mosaic_0001>
module attributes {stable_mosaic.version = 11 : i64} {
  func.func @actor_kernel(%arg0: i32, %arg1: memref<8x32xf32, #tpu.memory_space<vmem>>, %arg2: memref<32x128xbf16, #tpu.memory_space<vmem>>, %arg3: memref<1x128xf32, #tpu.memory_space<vmem>>, %arg4: memref<128x128xbf16, #tpu.memory_space<vmem>>, %arg5: memref<1x128xf32, #tpu.memory_space<vmem>>, %arg6: memref<128x128xbf16, #tpu.memory_space<vmem>>, %arg7: memref<1x128xf32, #tpu.memory_space<vmem>>, %arg8: memref<8x128xf32, #tpu.memory_space<vmem>>) attributes {dimension_semantics = [#tpu.dimension_semantics<parallel>], iteration_bounds = array<i64: 1>, scalar_prefetch = 0 : i64, scratch_operands = 0 : i64, tpu.core_type = #tpu.core_type<tc>, window_params = [{transform_indices = @transform_0, window_bounds = array<i64: 8, 32>}, {pipeline_mode = #tpu.pipeline_mode<synchronous>, transform_indices = @transform_1, window_bounds = array<i64: 32, 128>}, {pipeline_mode = #tpu.pipeline_mode<synchronous>, transform_indices = @transform_2, window_bounds = array<i64: 1, 128>}, {pipeline_mode = #tpu.pipeline_mode<synchronous>, transform_indices = @transform_3, window_bounds = array<i64: 128, 128>}, {pipeline_mode = #tpu.pipeline_mode<synchronous>, transform_indices = @transform_4, window_bounds = array<i64: 1, 128>}, {pipeline_mode = #tpu.pipeline_mode<synchronous>, transform_indices = @transform_5, window_bounds = array<i64: 128, 128>}, {pipeline_mode = #tpu.pipeline_mode<synchronous>, transform_indices = @transform_6, window_bounds = array<i64: 1, 128>}, {transform_indices = @transform_7, window_bounds = array<i64: 8, 128>}]} {
    %c0 = arith.constant 0 : index
    %c0_0 = arith.constant 0 : index
    %0 = vector.load %arg1[%c0, %c0_0] : memref<8x32xf32, #tpu.memory_space<vmem>>, vector<8x32xf32>
    %1 = arith.truncf %0 : vector<8x32xf32> to vector<8x32xbf16>
    %c0_1 = arith.constant 0 : index
    %c0_2 = arith.constant 0 : index
    %2 = vector.load %arg2[%c0_1, %c0_2] : memref<32x128xbf16, #tpu.memory_space<vmem>>, vector<32x128xbf16>
    %cst = arith.constant dense<0.000000e+00> : vector<8x128xf32>
    %3 = tpu.matmul %1, %2, %cst {dimension_numbers = #tpu.dot_dimension_numbers<[1], [0], [0], [1], [0, 0, 1, 1], [], []>} : vector<8x32xbf16>, vector<32x128xbf16>, vector<8x128xf32> -> vector<8x128xf32>
    %c0_3 = arith.constant 0 : index
    %c0_4 = arith.constant 0 : index
    %4 = vector.load %arg3[%c0_3, %c0_4] : memref<1x128xf32, #tpu.memory_space<vmem>>, vector<1x128xf32>
    %5 = vector.broadcast %4 : vector<1x128xf32> to vector<8x128xf32>
    %6 = arith.addf %3, %5 : vector<8x128xf32>
    %cst_5 = arith.constant 0.000000e+00 : f32
    %7 = vector.broadcast %cst_5 : f32 to vector<8x128xf32>
    %8 = arith.maximumf %6, %7 : vector<8x128xf32>
    %9 = arith.truncf %8 : vector<8x128xf32> to vector<8x128xbf16>
    %c0_6 = arith.constant 0 : index
    %c0_7 = arith.constant 0 : index
    %10 = vector.load %arg4[%c0_6, %c0_7] : memref<128x128xbf16, #tpu.memory_space<vmem>>, vector<128x128xbf16>
    %cst_8 = arith.constant dense<0.000000e+00> : vector<8x128xf32>
    %11 = tpu.matmul %9, %10, %cst_8 {dimension_numbers = #tpu.dot_dimension_numbers<[1], [0], [0], [1], [0, 0, 1, 1], [], []>} : vector<8x128xbf16>, vector<128x128xbf16>, vector<8x128xf32> -> vector<8x128xf32>
    %c0_9 = arith.constant 0 : index
    %c0_10 = arith.constant 0 : index
    %12 = vector.load %arg5[%c0_9, %c0_10] : memref<1x128xf32, #tpu.memory_space<vmem>>, vector<1x128xf32>
    %13 = vector.broadcast %12 : vector<1x128xf32> to vector<8x128xf32>
    %14 = arith.addf %11, %13 : vector<8x128xf32>
    %cst_11 = arith.constant 0.000000e+00 : f32
    %15 = vector.broadcast %cst_11 : f32 to vector<8x128xf32>
    %16 = arith.maximumf %14, %15 : vector<8x128xf32>
    %17 = arith.truncf %16 : vector<8x128xf32> to vector<8x128xbf16>
    %c0_12 = arith.constant 0 : index
    %c0_13 = arith.constant 0 : index
    %18 = vector.load %arg6[%c0_12, %c0_13] : memref<128x128xbf16, #tpu.memory_space<vmem>>, vector<128x128xbf16>
    %cst_14 = arith.constant dense<0.000000e+00> : vector<8x128xf32>
    %19 = tpu.matmul %17, %18, %cst_14 {dimension_numbers = #tpu.dot_dimension_numbers<[1], [0], [0], [1], [0, 0, 1, 1], [], []>} : vector<8x128xbf16>, vector<128x128xbf16>, vector<8x128xf32> -> vector<8x128xf32>
    %c0_15 = arith.constant 0 : index
    %c0_16 = arith.constant 0 : index
    %20 = vector.load %arg7[%c0_15, %c0_16] : memref<1x128xf32, #tpu.memory_space<vmem>>, vector<1x128xf32>
    %21 = vector.broadcast %20 : vector<1x128xf32> to vector<8x128xf32>
    %22 = arith.addf %19, %21 : vector<8x128xf32>
    %cst_17 = arith.constant dense<0xFF800000> : vector<8xf32>
    %23 = vector.multi_reduction <maximumf>, %22, %cst_17 [1] : vector<8x128xf32> to vector<8xf32>
    %24 = vector.shape_cast %23 : vector<8xf32> to vector<8x1xf32>
    %25 = vector.broadcast %24 : vector<8x1xf32> to vector<8x128xf32>
    %26 = arith.subf %22, %25 : vector<8x128xf32>
    %27 = math.exp %26 : vector<8x128xf32>
    %cst_18 = arith.constant dense<0.000000e+00> : vector<8xf32>
    %28 = vector.multi_reduction <add>, %27, %cst_18 [1] : vector<8x128xf32> to vector<8xf32>
    %29 = vector.shape_cast %28 : vector<8xf32> to vector<8x1xf32>
    %30 = tpu.reciprocal %29 {approx = true} : vector<8x1xf32> -> vector<8x1xf32>
    %31 = arith.mulf %29, %30 : vector<8x1xf32>
    %cst_19 = arith.constant 2.000000e+00 : f32
    %32 = vector.broadcast %cst_19 : f32 to vector<8x1xf32>
    %33 = arith.subf %32, %31 : vector<8x1xf32>
    %34 = arith.mulf %30, %33 : vector<8x1xf32>
    %35 = vector.broadcast %34 : vector<8x1xf32> to vector<8x128xf32>
    %36 = arith.mulf %27, %35 : vector<8x128xf32>
    %c0_20 = arith.constant 0 : index
    %c0_21 = arith.constant 0 : index
    %37 = vector.load %arg8[%c0_20, %c0_21] : memref<8x128xf32, #tpu.memory_space<vmem>>, vector<8x128xf32>
    tpu.vector_store %arg8[%c0_20, %c0_21], %36 {strides = array<i32>} : memref<8x128xf32, #tpu.memory_space<vmem>>, vector<8x128xf32>,
    return
  }
  func.func @transform_0(%arg0: i32) -> (i32, i32) {
    %c0_i32 = arith.constant 0 : i32
    %c0_i32_0 = arith.constant 0 : i32
    return %arg0, %c0_i32 : i32, i32
  }
  func.func @transform_1(%arg0: i32) -> (i32, i32) {
    %c0_i32 = arith.constant 0 : i32
    %c0_i32_0 = arith.constant 0 : i32
    %c0_i32_1 = arith.constant 0 : i32
    return %c0_i32, %c0_i32_0 : i32, i32
  }
  func.func @transform_2(%arg0: i32) -> (i32, i32) {
    %c0_i32 = arith.constant 0 : i32
    %c0_i32_0 = arith.constant 0 : i32
    %c0_i32_1 = arith.constant 0 : i32
    return %c0_i32, %c0_i32_0 : i32, i32
  }
  func.func @transform_3(%arg0: i32) -> (i32, i32) {
    %c0_i32 = arith.constant 0 : i32
    %c0_i32_0 = arith.constant 0 : i32
    %c0_i32_1 = arith.constant 0 : i32
    return %c0_i32, %c0_i32_0 : i32, i32
  }
  func.func @transform_4(%arg0: i32) -> (i32, i32) {
    %c0_i32 = arith.constant 0 : i32
    %c0_i32_0 = arith.constant 0 : i32
    %c0_i32_1 = arith.constant 0 : i32
    return %c0_i32, %c0_i32_0 : i32, i32
  }
  func.func @transform_5(%arg0: i32) -> (i32, i32) {
    %c0_i32 = arith.constant 0 : i32
    %c0_i32_0 = arith.constant 0 : i32
    %c0_i32_1 = arith.constant 0 : i32
    return %c0_i32, %c0_i32_0 : i32, i32
  }
  func.func @transform_6(%arg0: i32) -> (i32, i32) {
    %c0_i32 = arith.constant 0 : i32
    %c0_i32_0 = arith.constant 0 : i32
    %c0_i32_1 = arith.constant 0 : i32
    return %c0_i32, %c0_i32_0 : i32, i32
  }
  func.func @transform_7(%arg0: i32) -> (i32, i32) {
    %c0_i32 = arith.constant 0 : i32
    %c0_i32_0 = arith.constant 0 : i32
    return %arg0, %c0_i32 : i32, i32
  }
}

</mosaic_0001>

<llo_original>
// kernel: actor_forward.1
$region0: #{actor_forward.1}
  #allocation0 [shape = 'u32[]', space=smem, size = 0x4, offset = 0x4, fixed_abs, tag = 'smem constant byte address 0x4 - core index']
  #allocation1 [shape = 'u32[144,128]{1,0:T(1,128)}', space=vmem, size = 0x12000, scoped, tag = 'internal scratch']
  %s0 = inlined_call_operand.vmem [shape: f32[8,32], index: 0, kind: input, shape index: {}]
  %s1 = inlined_call_operand.vmem [shape: bf16[32,128], index: 1, kind: input, shape index: {}]
  %s2 = inlined_call_operand.vmem [shape: f32[1,128], index: 2, kind: input, shape index: {}]
  %s3 = inlined_call_operand.vmem [shape: bf16[128,128], index: 3, kind: input, shape index: {}]
  %s4 = inlined_call_operand.vmem [shape: f32[1,128], index: 4, kind: input, shape index: {}]
  %s5 = inlined_call_operand.vmem [shape: bf16[128,128], index: 5, kind: input, shape index: {}]
  %s6 = inlined_call_operand.vmem [shape: f32[1,128], index: 6, kind: input, shape index: {}]
  %s7 = inlined_call_operand.hbm [shape: f32[8,128], index: 7, kind: output, shape index: {}]
  %s8 = sld [smem:[#allocation0]]
  $region38: #{actor_forward.1} parent=0
    _
  %s10 = ssub.s32 1, %s8
  %s11 = scalar_select 0, %s10, %s8
  $region1: #{actor_forward.1} parent=0
    #allocation2 [shape = 'u8[4096]{0}', space=vmem, size = 0x1000, scoped, tag = 'output window, operand 0, single buffered']
    #allocation3 [shape = 's32[1]{0}', space=sflag, size = 0x4, scoped, tag = 'scoped memory for actor_forward.1']
    %12 = vsyncpa [#allocation3], 0
    // Predicated region
    $region2: #{actor_forward.1} parent=1 // pred_check
      _
    $region3: #{actor_forward.1} parent=1 // pred_check_branch
      %14 = sbr.rel (0) target = $region5
    $region4: #{actor_forward.1} parent=1 // pred_region
      _
    $region5: #{actor_forward.1} parent=1 // pred_fallthru
      _
    // Predicated region
    $region6: #{actor_forward.1} parent=1 // pred_check
      _
    $region7: #{actor_forward.1} parent=1 // pred_check_branch
      %16 = sbr.rel (0) target = $region9
    $region8: #{actor_forward.1} parent=1 // pred_region
      _
    $region9: #{actor_forward.1} parent=1 // pred_fallthru
      _
    // Predicated region
    $region10: #{actor_forward.1} parent=1 // pred_check
      _
    $region11: #{actor_forward.1} parent=1 // pred_check_branch
      %18 = sbr.rel (0) target = $region13
    $region12: #{actor_forward.1} parent=1 // pred_region
      _
    $region13: #{actor_forward.1} parent=1 // pred_fallthru
      _
    // Predicated region
    $region14: #{actor_forward.1} parent=1 // pred_check
      _
    $region15: #{actor_forward.1} parent=1 // pred_check_branch
      %20 = sbr.rel (0) target = $region17
    $region16: #{actor_forward.1} parent=1 // pred_region
      _
    $region17: #{actor_forward.1} parent=1 // pred_fallthru
      _
    // Predicated region
    $region18: #{actor_forward.1} parent=1 // pred_check
      _
    $region19: #{actor_forward.1} parent=1 // pred_check_branch
      %22 = sbr.rel (0) target = $region21
    $region20: #{actor_forward.1} parent=1 // pred_region
      _
    $region21: #{actor_forward.1} parent=1 // pred_fallthru
      _
    // Predicated region
    $region22: #{actor_forward.1} parent=1 // pred_check
      _
    $region23: #{actor_forward.1} parent=1 // pred_check_branch
      %24 = sbr.rel (0) target = $region25
    $region24: #{actor_forward.1} parent=1 // pred_region
      _
    $region25: #{actor_forward.1} parent=1 // pred_fallthru
      _
    // Predicated region
    $region26: #{actor_forward.1} parent=1 // pred_check
      _
    $region27: #{actor_forward.1} parent=1 // pred_check_branch
      %26 = sbr.rel (0) target = $region29
    $region28: #{actor_forward.1} parent=1 // pred_region
      _
    $region29: #{actor_forward.1} parent=1 // pred_fallthru
      _
    %v28 = vld [vmem:[%s0] sm:$0xff]
    %v29 = vpack.c.bf16 %v28, %v28
    %v30 = vld [vmem:[%s1] sm:$0xf]
    %v31 = vld [vmem:[%s1 + $0x4] sm:$0xf]
    %v32 = vld [vmem:[%s1 + $0x8] sm:$0xf]
    %v33 = vld [vmem:[%s1 + $0xc] sm:$0xf]
    %v34 = vld [vmem:[%s2] sm:$0x1]
    %v36 = vlaneseq
    %v37 = vshrl.u32 %v36, 7
    %v38 = vsub.s32 0, %v37
    %v39 = vrot.slane %v34, %v38
    %v45 = vunpack.c.l.b16 %v30
    %v46 = vunpack.c.l.b16 %v31
    %v47 = vunpack.c.l.b16 %v32
    %v48 = vunpack.c.l.b16 %v33
    %v49 = vpack.c.b16 %v46, %v45
    %v50 = vpack.c.b16 %v48, %v47
    %vm53 = vcmask 261120
    %v55 = vsel %vm53, %v29, 0
    %57 = vmatprep.subr.bf16.mxu0 0
    %58 = vmatpush1.bf16.msra.mxu0 0
    %59 = vmatprep.subr.bf16.mxu0 0
    %60 = vmatpush1.bf16.msra.mxu0 0
    %61 = vmatprep.subr.bf16.mxu0 0
    %62 = vmatpush1.bf16.msra.mxu0 0
    %63 = vmatprep.subr.bf16.mxu0 0
    %64 = vmatpush1.bf16.msra.mxu0 0
    %65 = vmatprep.subr.bf16.mxu0 0
    %66 = vmatpush1.bf16.msra.mxu0 0
    %67 = vmatprep.subr.bf16.mxu0 0
    %68 = vmatpush1.bf16.msra.mxu0 0
    %69 = vmatprep.subr.bf16.mxu0 0
    %70 = vmatpush1.bf16.msra.mxu0 %v50
    %71 = vmatprep.subr.bf16.mxu0 0
    %72 = vmatpush1.bf16.msra.mxu0 %v49
    %73 = vmatprep.subr.bf16.mxu0 0
    %74 = vmatpush2.bf16.msra.mxu0 0
    %75 = vmatprep.subr.bf16.mxu0 0
    %76 = vmatpush2.bf16.msra.mxu0 0
    %77 = vmatprep.subr.bf16.mxu0 0
    %78 = vmatpush2.bf16.msra.mxu0 0
    %79 = vmatprep.subr.bf16.mxu0 0
    %80 = vmatpush2.bf16.msra.mxu0 0
    %81 = vmatprep.subr.bf16.mxu0 0
    %82 = vmatpush2.bf16.msra.mxu0 0
    %83 = vmatprep.subr.bf16.mxu0 0
    %84 = vmatpush2.bf16.msra.mxu0 0
    %85 = vmatprep.subr.bf16.mxu0 0
    %86 = vmatpush2.bf16.msra.mxu0 0
    %87 = vmatprep.subr.bf16.mxu0 0
    %88 = vmatpush2.bf16.msra.mxu0 0
    %89 = vmatprep.mubr.bf16.mxu0 0
    %90 = vmatmul.mubr.bf16.gmra.mxu0 %v55
    %v91 = vpop.f32.mrf.mxu0
    %v92 = vadd.f32 %v39, %v91
    %v93 = vpop.f32.mrf.mxu0
    %v94 = vpop.f32.mrf.mxu0
    %v95 = vpop.f32.mrf.mxu0
    %96 = vdwg.mxu0
    %v97 = vmax.f32 %v92, 0.0
    %v98 = vpack.c.bf16 %v97, %v97
    %v99 = vld [vmem:[%s3] sm:$0xf]
    %v100 = vld [vmem:[%s3 + $0x4] sm:$0xf]
    %v101 = vld [vmem:[%s3 + $0x8] sm:$0xf]
    %v102 = vld [vmem:[%s3 + $0xc] sm:$0xf]
    %v103 = vld [vmem:[%s3 + $0x10] sm:$0xf]
    %v104 = vld [vmem:[%s3 + $0x14] sm:$0xf]
    %v105 = vld [vmem:[%s3 + $0x18] sm:$0xf]
    %v106 = vld [vmem:[%s3 + $0x1c] sm:$0xf]
    %v107 = vld [vmem:[%s3 + $0x20] sm:$0xf]
    %v108 = vld [vmem:[%s3 + $0x24] sm:$0xf]
    %v109 = vld [vmem:[%s3 + $0x28] sm:$0xf]
    %v110 = vld [vmem:[%s3 + $0x2c] sm:$0xf]
    %v111 = vld [vmem:[%s3 + $0x30] sm:$0xf]
    %v112 = vld [vmem:[%s3 + $0x34] sm:$0xf]
    %v113 = vld [vmem:[%s3 + $0x38] sm:$0xf]
    %v114 = vld [vmem:[%s3 + $0x3c] sm:$0xf]
    %v115 = vld [vmem:[%s4] sm:$0x1]
    %v117 = vlaneseq
    %v118 = vshrl.u32 %v117, 7
    %v119 = vsub.s32 0, %v118
    %v120 = vrot.slane %v115, %v119
    %v138 = vunpack.c.l.b16 %v99
    %v139 = vunpack.c.l.b16 %v100
    %v140 = vunpack.c.l.b16 %v101
    %v141 = vunpack.c.l.b16 %v102
    %v142 = vunpack.c.l.b16 %v103
    %v143 = vunpack.c.l.b16 %v104
    %v144 = vunpack.c.l.b16 %v105
    %v145 = vunpack.c.l.b16 %v106
    %v146 = vunpack.c.l.b16 %v107
    %v147 = vunpack.c.l.b16 %v108
    %v148 = vunpack.c.l.b16 %v109
    %v149 = vunpack.c.l.b16 %v110
    %v150 = vunpack.c.l.b16 %v111
    %v151 = vunpack.c.l.b16 %v112
    %v152 = vunpack.c.l.b16 %v113
    %v153 = vunpack.c.l.b16 %v114
    %v154 = vpack.c.b16 %v139, %v138
    %v155 = vpack.c.b16 %v141, %v140
    %v156 = vpack.c.b16 %v143, %v142
    %v157 = vpack.c.b16 %v145, %v144
    %v158 = vpack.c.b16 %v147, %v146
    %v159 = vpack.c.b16 %v149, %v148
    %v160 = vpack.c.b16 %v151, %v150
    %v161 = vpack.c.b16 %v153, %v152
    %170 = vmatprep.subr.bf16.mxu0 0
    %171 = vmatpush1.bf16.msra.mxu0 %v161
    %172 = vmatprep.subr.bf16.mxu0 0
    %173 = vmatpush1.bf16.msra.mxu0 %v160
    %174 = vmatprep.subr.bf16.mxu0 0
    %175 = vmatpush1.bf16.msra.mxu0 %v159
    %176 = vmatprep.subr.bf16.mxu0 0
    %177 = vmatpush1.bf16.msra.mxu0 %v158
    %178 = vmatprep.subr.bf16.mxu0 0
    %179 = vmatpush1.bf16.msra.mxu0 %v157
    %180 = vmatprep.subr.bf16.mxu0 0
    %181 = vmatpush1.bf16.msra.mxu0 %v156
    %182 = vmatprep.subr.bf16.mxu0 0
    %183 = vmatpush1.bf16.msra.mxu0 %v155
    %184 = vmatprep.subr.bf16.mxu0 0
    %185 = vmatpush1.bf16.msra.mxu0 %v154
    %186 = vmatprep.subr.bf16.mxu0 0
    %187 = vmatpush2.bf16.msra.mxu0 0
    %188 = vmatprep.subr.bf16.mxu0 0
    %189 = vmatpush2.bf16.msra.mxu0 0
    %190 = vmatprep.subr.bf16.mxu0 0
    %191 = vmatpush2.bf16.msra.mxu0 0
    %192 = vmatprep.subr.bf16.mxu0 0
    %193 = vmatpush2.bf16.msra.mxu0 0
    %194 = vmatprep.subr.bf16.mxu0 0
    %195 = vmatpush2.bf16.msra.mxu0 0
    %196 = vmatprep.subr.bf16.mxu0 0
    %197 = vmatpush2.bf16.msra.mxu0 0
    %198 = vmatprep.subr.bf16.mxu0 0
    %199 = vmatpush2.bf16.msra.mxu0 0
    %200 = vmatprep.subr.bf16.mxu0 0
    %201 = vmatpush2.bf16.msra.mxu0 0
    %202 = vmatprep.mubr.bf16.mxu0 0
    %203 = vmatmul.mubr.bf16.gmra.mxu0 %v98
    %v204 = vpop.f32.mrf.mxu0
    %v205 = vadd.f32 %v120, %v204
    %v206 = vpop.f32.mrf.mxu0
    %v207 = vpop.f32.mrf.mxu0
    %v208 = vpop.f32.mrf.mxu0
    %209 = vdwg.mxu0
    %v210 = vmax.f32 %v205, 0.0
    %v211 = vpack.c.bf16 %v210, %v210
    %v212 = vld [vmem:[%s5] sm:$0xf]
    %v213 = vld [vmem:[%s5 + $0x4] sm:$0xf]
    %v214 = vld [vmem:[%s5 + $0x8] sm:$0xf]
    %v215 = vld [vmem:[%s5 + $0xc] sm:$0xf]
    %v216 = vld [vmem:[%s5 + $0x10] sm:$0xf]
    %v217 = vld [vmem:[%s5 + $0x14] sm:$0xf]
    %v218 = vld [vmem:[%s5 + $0x18] sm:$0xf]
    %v219 = vld [vmem:[%s5 + $0x1c] sm:$0xf]
    %v220 = vld [vmem:[%s5 + $0x20] sm:$0xf]
    %v221 = vld [vmem:[%s5 + $0x24] sm:$0xf]
    %v222 = vld [vmem:[%s5 + $0x28] sm:$0xf]
    %v223 = vld [vmem:[%s5 + $0x2c] sm:$0xf]
    %v224 = vld [vmem:[%s5 + $0x30] sm:$0xf]
    %v225 = vld [vmem:[%s5 + $0x34] sm:$0xf]
    %v226 = vld [vmem:[%s5 + $0x38] sm:$0xf]
    %v227 = vld [vmem:[%s5 + $0x3c] sm:$0xf]
    %v228 = vld [vmem:[%s6] sm:$0x1]
    %v230 = vlaneseq
    %v231 = vshrl.u32 %v230, 7
    %v232 = vsub.s32 0, %v231
    %v233 = vrot.slane %v228, %v232
    %v251 = vunpack.c.l.b16 %v212
    %v252 = vunpack.c.l.b16 %v213
    %v253 = vunpack.c.l.b16 %v214
    %v254 = vunpack.c.l.b16 %v215
    %v255 = vunpack.c.l.b16 %v216
    %v256 = vunpack.c.l.b16 %v217
    %v257 = vunpack.c.l.b16 %v218
    %v258 = vunpack.c.l.b16 %v219
    %v259 = vunpack.c.l.b16 %v220
    %v260 = vunpack.c.l.b16 %v221
    %v261 = vunpack.c.l.b16 %v222
    %v262 = vunpack.c.l.b16 %v223
    %v263 = vunpack.c.l.b16 %v224
    %v264 = vunpack.c.l.b16 %v225
    %v265 = vunpack.c.l.b16 %v226
    %v266 = vunpack.c.l.b16 %v227
    %v267 = vpack.c.b16 %v252, %v251
    %v268 = vpack.c.b16 %v254, %v253
    %v269 = vpack.c.b16 %v256, %v255
    %v270 = vpack.c.b16 %v258, %v257
    %v271 = vpack.c.b16 %v260, %v259
    %v272 = vpack.c.b16 %v262, %v261
    %v273 = vpack.c.b16 %v264, %v263
    %v274 = vpack.c.b16 %v266, %v265
    %283 = vmatprep.subr.bf16.mxu0 0
    %284 = vmatpush1.bf16.msra.mxu0 %v274
    %285 = vmatprep.subr.bf16.mxu0 0
    %286 = vmatpush1.bf16.msra.mxu0 %v273
    %287 = vmatprep.subr.bf16.mxu0 0
    %288 = vmatpush1.bf16.msra.mxu0 %v272
    %289 = vmatprep.subr.bf16.mxu0 0
    %290 = vmatpush1.bf16.msra.mxu0 %v271
    %291 = vmatprep.subr.bf16.mxu0 0
    %292 = vmatpush1.bf16.msra.mxu0 %v270
    %293 = vmatprep.subr.bf16.mxu0 0
    %294 = vmatpush1.bf16.msra.mxu0 %v269
    %295 = vmatprep.subr.bf16.mxu0 0
    %296 = vmatpush1.bf16.msra.mxu0 %v268
    %297 = vmatprep.subr.bf16.mxu0 0
    %298 = vmatpush1.bf16.msra.mxu0 %v267
    %299 = vmatprep.subr.bf16.mxu0 0
    %300 = vmatpush2.bf16.msra.mxu0 0
    %301 = vmatprep.subr.bf16.mxu0 0
    %302 = vmatpush2.bf16.msra.mxu0 0
    %303 = vmatprep.subr.bf16.mxu0 0
    %304 = vmatpush2.bf16.msra.mxu0 0
    %305 = vmatprep.subr.bf16.mxu0 0
    %306 = vmatpush2.bf16.msra.mxu0 0
    %307 = vmatprep.subr.bf16.mxu0 0
    %308 = vmatpush2.bf16.msra.mxu0 0
    %309 = vmatprep.subr.bf16.mxu0 0
    %310 = vmatpush2.bf16.msra.mxu0 0
    %311 = vmatprep.subr.bf16.mxu0 0
    %312 = vmatpush2.bf16.msra.mxu0 0
    %313 = vmatprep.subr.bf16.mxu0 0
    %314 = vmatpush2.bf16.msra.mxu0 0
    %315 = vmatprep.mubr.bf16.mxu0 0
    %316 = vmatmul.mubr.bf16.gmra.mxu0 %v211
    %v317 = vpop.f32.mrf.mxu0
    %v318 = vadd.f32 %v233, %v317
    %v319 = vpop.f32.mrf.mxu0
    %v320 = vpop.f32.mrf.mxu0
    %v321 = vpop.f32.mrf.mxu0
    %322 = vdwg.mxu0
    %323 = vmax.xlane.f32.xlu0 %v318
    %v324 = vpop.xlane.xlu0 %323
    %v325 = vsub.f32 %v318, %v324
    %v326 = vmul.f32 %v325, 1.442695
    %v327 = vpow.pop %v326
    %328 = vadd.xlane.f32.xlu0 %v327
    %v329 = vpop.xlane.xlu0 %328
    %v330 = vrcp.pop %v329
    %v331 = vmul.f32 %v329, %v330
    %v332 = vsub.f32 2.0, %v331
    %v333 = vmul.f32 %v330, %v332
    %v334 = vmul.f32 %v327, %v333
    %335 = vst [vmem:[#allocation2] sm:$0xff] %v334
    // Predicated region
    $region30: #{actor_forward.1} parent=1 // pred_check
      _
    $region31: #{actor_forward.1} parent=1 // pred_check_branch
      %337 = sbr.rel (0) target = $region33
    $region32: #{actor_forward.1} parent=1 // pred_region
      %s339 = ssub.s32 128, 128
      %340 = vsyncadd [#allocation3], %s339
      %s342 = sshll.u32 [#allocation2], 4
      %s343 = int_to_ptr.vmem [resolvable:$true] %s342
      %345 = dma.vmem_to_hbm [thread:$0]  %s343, 128, %s7, [#allocation3]
    $region33: #{actor_forward.1} parent=1 // pred_fallthru
      _
    // Predicated region
    $region34: #{actor_forward.1} parent=1 // pred_check
      _
    $region35: #{actor_forward.1} parent=1 // pred_check_branch
      %347 = sbr.rel (0) target = $region37
    $region36: #{actor_forward.1} parent=1 // pred_region
      %348 = dma.done [#allocation3], 128
    $region37: #{actor_forward.1} parent=1 // pred_fallthru
      _
    %349 = vsyncpa [#allocation3], 1

</llo_original>
